<compile_context>
chip_gen: v6e
topology: v6e:2x2x1
jax: 0.10.0
libtpu: 0.0.40
codegen_flags: <defaults>
</compile_context>

<pallas_src>
import functools
import numpy as np
import jax
import jax.numpy as jnp
from jax.experimental import pallas as pl
from jax.experimental.pallas import tpu as pltpu


def _mapping_kernel(z_ref, w_ref, b_ref, out_ref, *,
                    true_dim, eps, negative_slope, normalize):
    # z_ref:   (TB, Zp)        current batch tile (feature dim zero-padded)
    # w_ref:   (deep, Zp, Zp)  stacked W_i.T (already transposed in wrapper)
    # b_ref:   (deep, 1, Zp)   stacked biases
    # out_ref: (TB, Zp)
    x = z_ref[...].astype(jnp.float32)

    if normalize:
        # Padded lanes are zero, so sum-of-squares equals the true sum; divide
        # by the TRUE feature count to get the mean (matches Normalize_2D).
        ssq = jnp.sum(x * x, axis=-1, keepdims=True)          # (TB, 1)
        x = x * jax.lax.rsqrt(ssq * (1.0 / true_dim) + eps)

    deep = w_ref.shape[0]
    for i in range(deep):                                     # static unroll
        h = jnp.dot(x, w_ref[i],
                    preferred_element_type=jnp.float32) + b_ref[i]   # (TB, Zp)
        x = jnp.where(h > 0, h, negative_slope * h)           # LeakyReLU(0.2)

    out_ref[...] = x.astype(out_ref.dtype)


def mapping_forward(z, weights, biases, *, eps=1e-8, normalize=True,
                    negative_slope=0.2, batch_tile=128):
    """z: (B, Z); weights: (deep, Z, Z) in PyTorch (out, in) layout;
    biases: (deep, Z). Returns (B, Z)."""
    b, zd = z.shape
    deep, out_d, in_d = weights.shape
    assert out_d == zd and in_d == zd

    # ---------------- layout glue (zero FLOPs) ----------------
    zp = ((zd + 127) // 128) * 128                 # lane-dense feature dim
    if b > batch_tile:
        tb = batch_tile                            # multiple of 8
    else:
        tb = ((b + 7) // 8) * 8                    # sublane-aligned
    bp = ((b + tb - 1) // tb) * tb                 # batch padded to tile mult.

    z_p = jnp.pad(z, ((0, bp - b), (0, zp - zd)))
    w_t = jnp.transpose(weights, (0, 2, 1))        # (deep, in, out): x @ w == x @ W.T
    w_p = jnp.pad(w_t, ((0, 0), (0, zp - zd), (0, zp - zd)))
    b_p = jnp.pad(biases, ((0, 0), (0, zp - zd))).reshape(deep, 1, zp)

    out = pl.pallas_call(
        functools.partial(_mapping_kernel, true_dim=float(zd), eps=eps,
                          negative_slope=negative_slope, normalize=normalize),
        out_shape=jax.ShapeDtypeStruct((bp, zp), z.dtype),
        grid_spec=pltpu.PrefetchScalarGridSpec(
            num_scalar_prefetch=0,
            grid=(bp // tb,),
            in_specs=[
                pl.BlockSpec((tb, zp), lambda i: (i, 0)),          # z tile
                pl.BlockSpec((deep, zp, zp), lambda i: (0, 0, 0)),  # weights (resident)
                pl.BlockSpec((deep, 1, zp), lambda i: (0, 0, 0)),   # biases  (resident)
            ],
            out_specs=pl.BlockSpec((tb, zp), lambda i: (i, 0)),
        ),
        compiler_params=pltpu.CompilerParams(
            dimension_semantics=("parallel",)),
    )(z_p, w_p, b_p)

    return out[:b, :zd]


def reference(z, weights, biases, *, eps=1e-8, normalize=True,
              negative_slope=0.2):
    """Pure-JAX reference mirroring the PyTorch Mapping.forward."""
    if normalize:
        z = z * jax.lax.rsqrt(jnp.mean(jnp.square(z), axis=-1, keepdims=True)
                              + eps)
    for i in range(weights.shape[0]):
        h = jnp.dot(z, weights[i].T,
                    precision=jax.lax.Precision.HIGHEST) + biases[i]
        z = jnp.where(h > 0, h, negative_slope * h)
    return z


if __name__ == "__main__":
    key = jax.random.PRNGKey(0)
    batch, z_dim, deep = 2, 32, 8
    k_w, k_z = jax.random.split(key, 2)

    # Deterministic parameter init mirroring __init__:
    #   Linear weights: xavier_normal_  (std = sqrt(2 / (fan_in + fan_out)))
    #   Linear biases:  zeros_
    std = (2.0 / (z_dim + z_dim)) ** 0.5
    weights = std * jax.random.normal(k_w, (deep, z_dim, z_dim), jnp.float32)
    biases = jnp.zeros((deep, z_dim), jnp.float32)

    z = jax.random.normal(k_z, (batch, z_dim), jnp.float32)

    out = mapping_forward(z, weights, biases)
    out = jax.block_until_ready(out)

    ref = reference(z, weights, biases)
    np.testing.assert_allclose(np.asarray(out), np.asarray(ref),
                               rtol=1e-3, atol=1e-3)
    print("KERNEL_OK")
</pallas_src>

<mosaic_0001>
module attributes {stable_mosaic.version = 11 : i64} {
  func.func @_mapping_kernel(%arg0: i32, %arg1: memref<8x128xf32, #tpu.memory_space<vmem>>, %arg2: memref<8x128x128xf32, #tpu.memory_space<vmem>>, %arg3: memref<8x1x128xf32, #tpu.memory_space<vmem>>, %arg4: memref<8x128xf32, #tpu.memory_space<vmem>>) attributes {dimension_semantics = [#tpu.dimension_semantics<parallel>], iteration_bounds = array<i64: 1>, scalar_prefetch = 0 : i64, scratch_operands = 0 : i64, tpu.core_type = #tpu.core_type<tc>, window_params = [{transform_indices = @transform_0, window_bounds = array<i64: 8, 128>}, {pipeline_mode = #tpu.pipeline_mode<synchronous>, transform_indices = @transform_1, window_bounds = array<i64: 8, 128, 128>}, {pipeline_mode = #tpu.pipeline_mode<synchronous>, transform_indices = @transform_2, window_bounds = array<i64: 8, 1, 128>}, {transform_indices = @transform_3, window_bounds = array<i64: 8, 128>}]} {
    %c0 = arith.constant 0 : index
    %c0_0 = arith.constant 0 : index
    %0 = vector.load %arg1[%c0, %c0_0] : memref<8x128xf32, #tpu.memory_space<vmem>>, vector<8x128xf32>
    %1 = arith.mulf %0, %0 : vector<8x128xf32>
    %cst = arith.constant dense<0.000000e+00> : vector<8xf32>
    %2 = vector.multi_reduction <add>, %1, %cst [1] : vector<8x128xf32> to vector<8xf32>
    %3 = vector.shape_cast %2 : vector<8xf32> to vector<8x1xf32>
    %cst_1 = arith.constant 3.125000e-02 : f32
    %4 = vector.broadcast %cst_1 : f32 to vector<8x1xf32>
    %5 = arith.mulf %3, %4 : vector<8x1xf32>
    %cst_2 = arith.constant 9.99999993E-9 : f32
    %6 = vector.broadcast %cst_2 : f32 to vector<8x1xf32>
    %7 = arith.addf %5, %6 : vector<8x1xf32>
    %8 = math.rsqrt %7 : vector<8x1xf32>
    %9 = vector.broadcast %8 : vector<8x1xf32> to vector<8x128xf32>
    %10 = arith.mulf %0, %9 : vector<8x128xf32>
    %c0_3 = arith.constant 0 : index
    %c0_4 = arith.constant 0 : index
    %c0_5 = arith.constant 0 : index
    %11 = vector.load %arg2[%c0_3, %c0_4, %c0_5] : memref<8x128x128xf32, #tpu.memory_space<vmem>>, vector<1x128x128xf32>
    %12 = vector.shape_cast %11 : vector<1x128x128xf32> to vector<128x128xf32>
    %cst_6 = arith.constant dense<0.000000e+00> : vector<8x128xf32>
    %13 = tpu.matmul %10, %12, %cst_6 {dimension_numbers = #tpu.dot_dimension_numbers<[1], [0], [0], [1], [0, 0, 1, 1], [], []>} : vector<8x128xf32>, vector<128x128xf32>, vector<8x128xf32> -> vector<8x128xf32>
    %c0_7 = arith.constant 0 : index
    %c0_8 = arith.constant 0 : index
    %c0_9 = arith.constant 0 : index
    %14 = vector.load %arg3[%c0_7, %c0_8, %c0_9] : memref<8x1x128xf32, #tpu.memory_space<vmem>>, vector<1x1x128xf32>
    %15 = vector.shape_cast %14 : vector<1x1x128xf32> to vector<1x128xf32>
    %16 = vector.broadcast %15 : vector<1x128xf32> to vector<8x128xf32>
    %17 = arith.addf %13, %16 : vector<8x128xf32>
    %cst_10 = arith.constant 0.000000e+00 : f32
    %18 = vector.broadcast %cst_10 : f32 to vector<8x128xf32>
    %19 = arith.cmpf ogt, %17, %18 : vector<8x128xf32>
    %cst_11 = arith.constant 2.000000e-01 : f32
    %20 = vector.broadcast %cst_11 : f32 to vector<8x128xf32>
    %21 = arith.mulf %20, %17 : vector<8x128xf32>
    %22 = arith.select %19, %17, %21 : vector<8x128xi1>, vector<8x128xf32>
    %c1 = arith.constant 1 : index
    %c0_12 = arith.constant 0 : index
    %c0_13 = arith.constant 0 : index
    %23 = vector.load %arg2[%c1, %c0_12, %c0_13] : memref<8x128x128xf32, #tpu.memory_space<vmem>>, vector<1x128x128xf32>
    %24 = vector.shape_cast %23 : vector<1x128x128xf32> to vector<128x128xf32>
    %cst_14 = arith.constant dense<0.000000e+00> : vector<8x128xf32>
    %25 = tpu.matmul %22, %24, %cst_14 {dimension_numbers = #tpu.dot_dimension_numbers<[1], [0], [0], [1], [0, 0, 1, 1], [], []>} : vector<8x128xf32>, vector<128x128xf32>, vector<8x128xf32> -> vector<8x128xf32>
    %c1_15 = arith.constant 1 : index
    %c0_16 = arith.constant 0 : index
    %c0_17 = arith.constant 0 : index
    %26 = vector.load %arg3[%c1_15, %c0_16, %c0_17] : memref<8x1x128xf32, #tpu.memory_space<vmem>>, vector<1x1x128xf32>
    %27 = vector.shape_cast %26 : vector<1x1x128xf32> to vector<1x128xf32>
    %28 = vector.broadcast %27 : vector<1x128xf32> to vector<8x128xf32>
    %29 = arith.addf %25, %28 : vector<8x128xf32>
    %cst_18 = arith.constant 0.000000e+00 : f32
    %30 = vector.broadcast %cst_18 : f32 to vector<8x128xf32>
    %31 = arith.cmpf ogt, %29, %30 : vector<8x128xf32>
    %cst_19 = arith.constant 2.000000e-01 : f32
    %32 = vector.broadcast %cst_19 : f32 to vector<8x128xf32>
    %33 = arith.mulf %32, %29 : vector<8x128xf32>
    %34 = arith.select %31, %29, %33 : vector<8x128xi1>, vector<8x128xf32>
    %c2 = arith.constant 2 : index
    %c0_20 = arith.constant 0 : index
    %c0_21 = arith.constant 0 : index
    %35 = vector.load %arg2[%c2, %c0_20, %c0_21] : memref<8x128x128xf32, #tpu.memory_space<vmem>>, vector<1x128x128xf32>
    %36 = vector.shape_cast %35 : vector<1x128x128xf32> to vector<128x128xf32>
    %cst_22 = arith.constant dense<0.000000e+00> : vector<8x128xf32>
    %37 = tpu.matmul %34, %36, %cst_22 {dimension_numbers = #tpu.dot_dimension_numbers<[1], [0], [0], [1], [0, 0, 1, 1], [], []>} : vector<8x128xf32>, vector<128x128xf32>, vector<8x128xf32> -> vector<8x128xf32>
    %c2_23 = arith.constant 2 : index
    %c0_24 = arith.constant 0 : index
    %c0_25 = arith.constant 0 : index
    %38 = vector.load %arg3[%c2_23, %c0_24, %c0_25] : memref<8x1x128xf32, #tpu.memory_space<vmem>>, vector<1x1x128xf32>
    %39 = vector.shape_cast %38 : vector<1x1x128xf32> to vector<1x128xf32>
    %40 = vector.broadcast %39 : vector<1x128xf32> to vector<8x128xf32>
    %41 = arith.addf %37, %40 : vector<8x128xf32>
    %cst_26 = arith.constant 0.000000e+00 : f32
    %42 = vector.broadcast %cst_26 : f32 to vector<8x128xf32>
    %43 = arith.cmpf ogt, %41, %42 : vector<8x128xf32>
    %cst_27 = arith.constant 2.000000e-01 : f32
    %44 = vector.broadcast %cst_27 : f32 to vector<8x128xf32>
    %45 = arith.mulf %44, %41 : vector<8x128xf32>
    %46 = arith.select %43, %41, %45 : vector<8x128xi1>, vector<8x128xf32>
    %c3 = arith.constant 3 : index
    %c0_28 = arith.constant 0 : index
    %c0_29 = arith.constant 0 : index
    %47 = vector.load %arg2[%c3, %c0_28, %c0_29] : memref<8x128x128xf32, #tpu.memory_space<vmem>>, vector<1x128x128xf32>
    %48 = vector.shape_cast %47 : vector<1x128x128xf32> to vector<128x128xf32>
    %cst_30 = arith.constant dense<0.000000e+00> : vector<8x128xf32>
    %49 = tpu.matmul %46, %48, %cst_30 {dimension_numbers = #tpu.dot_dimension_numbers<[1], [0], [0], [1], [0, 0, 1, 1], [], []>} : vector<8x128xf32>, vector<128x128xf32>, vector<8x128xf32> -> vector<8x128xf32>
    %c3_31 = arith.constant 3 : index
    %c0_32 = arith.constant 0 : index
    %c0_33 = arith.constant 0 : index
    %50 = vector.load %arg3[%c3_31, %c0_32, %c0_33] : memref<8x1x128xf32, #tpu.memory_space<vmem>>, vector<1x1x128xf32>
    %51 = vector.shape_cast %50 : vector<1x1x128xf32> to vector<1x128xf32>
    %52 = vector.broadcast %51 : vector<1x128xf32> to vector<8x128xf32>
    %53 = arith.addf %49, %52 : vector<8x128xf32>
    %cst_34 = arith.constant 0.000000e+00 : f32
    %54 = vector.broadcast %cst_34 : f32 to vector<8x128xf32>
    %55 = arith.cmpf ogt, %53, %54 : vector<8x128xf32>
    %cst_35 = arith.constant 2.000000e-01 : f32
    %56 = vector.broadcast %cst_35 : f32 to vector<8x128xf32>
    %57 = arith.mulf %56, %53 : vector<8x128xf32>
    %58 = arith.select %55, %53, %57 : vector<8x128xi1>, vector<8x128xf32>
    %c4 = arith.constant 4 : index
    %c0_36 = arith.constant 0 : index
    %c0_37 = arith.constant 0 : index
    %59 = vector.load %arg2[%c4, %c0_36, %c0_37] : memref<8x128x128xf32, #tpu.memory_space<vmem>>, vector<1x128x128xf32>
    %60 = vector.shape_cast %59 : vector<1x128x128xf32> to vector<128x128xf32>
    %cst_38 = arith.constant dense<0.000000e+00> : vector<8x128xf32>
    %61 = tpu.matmul %58, %60, %cst_38 {dimension_numbers = #tpu.dot_dimension_numbers<[1], [0], [0], [1], [0, 0, 1, 1], [], []>} : vector<8x128xf32>, vector<128x128xf32>, vector<8x128xf32> -> vector<8x128xf32>
    %c4_39 = arith.constant 4 : index
    %c0_40 = arith.constant 0 : index
    %c0_41 = arith.constant 0 : index
    %62 = vector.load %arg3[%c4_39, %c0_40, %c0_41] : memref<8x1x128xf32, #tpu.memory_space<vmem>>, vector<1x1x128xf32>
    %63 = vector.shape_cast %62 : vector<1x1x128xf32> to vector<1x128xf32>
    %64 = vector.broadcast %63 : vector<1x128xf32> to vector<8x128xf32>
    %65 = arith.addf %61, %64 : vector<8x128xf32>
    %cst_42 = arith.constant 0.000000e+00 : f32
    %66 = vector.broadcast %cst_42 : f32 to vector<8x128xf32>
    %67 = arith.cmpf ogt, %65, %66 : vector<8x128xf32>
    %cst_43 = arith.constant 2.000000e-01 : f32
    %68 = vector.broadcast %cst_43 : f32 to vector<8x128xf32>
    %69 = arith.mulf %68, %65 : vector<8x128xf32>
    %70 = arith.select %67, %65, %69 : vector<8x128xi1>, vector<8x128xf32>
    %c5 = arith.constant 5 : index
    %c0_44 = arith.constant 0 : index
    %c0_45 = arith.constant 0 : index
    %71 = vector.load %arg2[%c5, %c0_44, %c0_45] : memref<8x128x128xf32, #tpu.memory_space<vmem>>, vector<1x128x128xf32>
    %72 = vector.shape_cast %71 : vector<1x128x128xf32> to vector<128x128xf32>
    %cst_46 = arith.constant dense<0.000000e+00> : vector<8x128xf32>
    %73 = tpu.matmul %70, %72, %cst_46 {dimension_numbers = #tpu.dot_dimension_numbers<[1], [0], [0], [1], [0, 0, 1, 1], [], []>} : vector<8x128xf32>, vector<128x128xf32>, vector<8x128xf32> -> vector<8x128xf32>
    %c5_47 = arith.constant 5 : index
    %c0_48 = arith.constant 0 : index
    %c0_49 = arith.constant 0 : index
    %74 = vector.load %arg3[%c5_47, %c0_48, %c0_49] : memref<8x1x128xf32, #tpu.memory_space<vmem>>, vector<1x1x128xf32>
    %75 = vector.shape_cast %74 : vector<1x1x128xf32> to vector<1x128xf32>
    %76 = vector.broadcast %75 : vector<1x128xf32> to vector<8x128xf32>
    %77 = arith.addf %73, %76 : vector<8x128xf32>
    %cst_50 = arith.constant 0.000000e+00 : f32
    %78 = vector.broadcast %cst_50 : f32 to vector<8x128xf32>
    %79 = arith.cmpf ogt, %77, %78 : vector<8x128xf32>
    %cst_51 = arith.constant 2.000000e-01 : f32
    %80 = vector.broadcast %cst_51 : f32 to vector<8x128xf32>
    %81 = arith.mulf %80, %77 : vector<8x128xf32>
    %82 = arith.select %79, %77, %81 : vector<8x128xi1>, vector<8x128xf32>
    %c6 = arith.constant 6 : index
    %c0_52 = arith.constant 0 : index
    %c0_53 = arith.constant 0 : index
    %83 = vector.load %arg2[%c6, %c0_52, %c0_53] : memref<8x128x128xf32, #tpu.memory_space<vmem>>, vector<1x128x128xf32>
    %84 = vector.shape_cast %83 : vector<1x128x128xf32> to vector<128x128xf32>
    %cst_54 = arith.constant dense<0.000000e+00> : vector<8x128xf32>
    %85 = tpu.matmul %82, %84, %cst_54 {dimension_numbers = #tpu.dot_dimension_numbers<[1], [0], [0], [1], [0, 0, 1, 1], [], []>} : vector<8x128xf32>, vector<128x128xf32>, vector<8x128xf32> -> vector<8x128xf32>
    %c6_55 = arith.constant 6 : index
    %c0_56 = arith.constant 0 : index
    %c0_57 = arith.constant 0 : index
    %86 = vector.load %arg3[%c6_55, %c0_56, %c0_57] : memref<8x1x128xf32, #tpu.memory_space<vmem>>, vector<1x1x128xf32>
    %87 = vector.shape_cast %86 : vector<1x1x128xf32> to vector<1x128xf32>
    %88 = vector.broadcast %87 : vector<1x128xf32> to vector<8x128xf32>
    %89 = arith.addf %85, %88 : vector<8x128xf32>
    %cst_58 = arith.constant 0.000000e+00 : f32
    %90 = vector.broadcast %cst_58 : f32 to vector<8x128xf32>
    %91 = arith.cmpf ogt, %89, %90 : vector<8x128xf32>
    %cst_59 = arith.constant 2.000000e-01 : f32
    %92 = vector.broadcast %cst_59 : f32 to vector<8x128xf32>
    %93 = arith.mulf %92, %89 : vector<8x128xf32>
    %94 = arith.select %91, %89, %93 : vector<8x128xi1>, vector<8x128xf32>
    %c7 = arith.constant 7 : index
    %c0_60 = arith.constant 0 : index
    %c0_61 = arith.constant 0 : index
    %95 = vector.load %arg2[%c7, %c0_60, %c0_61] : memref<8x128x128xf32, #tpu.memory_space<vmem>>, vector<1x128x128xf32>
    %96 = vector.shape_cast %95 : vector<1x128x128xf32> to vector<128x128xf32>
    %cst_62 = arith.constant dense<0.000000e+00> : vector<8x128xf32>
    %97 = tpu.matmul %94, %96, %cst_62 {dimension_numbers = #tpu.dot_dimension_numbers<[1], [0], [0], [1], [0, 0, 1, 1], [], []>} : vector<8x128xf32>, vector<128x128xf32>, vector<8x128xf32> -> vector<8x128xf32>
    %c7_63 = arith.constant 7 : index
    %c0_64 = arith.constant 0 : index
    %c0_65 = arith.constant 0 : index
    %98 = vector.load %arg3[%c7_63, %c0_64, %c0_65] : memref<8x1x128xf32, #tpu.memory_space<vmem>>, vector<1x1x128xf32>
    %99 = vector.shape_cast %98 : vector<1x1x128xf32> to vector<1x128xf32>
    %100 = vector.broadcast %99 : vector<1x128xf32> to vector<8x128xf32>
    %101 = arith.addf %97, %100 : vector<8x128xf32>
    %cst_66 = arith.constant 0.000000e+00 : f32
    %102 = vector.broadcast %cst_66 : f32 to vector<8x128xf32>
    %103 = arith.cmpf ogt, %101, %102 : vector<8x128xf32>
    %cst_67 = arith.constant 2.000000e-01 : f32
    %104 = vector.broadcast %cst_67 : f32 to vector<8x128xf32>
    %105 = arith.mulf %104, %101 : vector<8x128xf32>
    %106 = arith.select %103, %101, %105 : vector<8x128xi1>, vector<8x128xf32>
    %c0_68 = arith.constant 0 : index
    %c0_69 = arith.constant 0 : index
    %107 = vector.load %arg4[%c0_68, %c0_69] : memref<8x128xf32, #tpu.memory_space<vmem>>, vector<8x128xf32>
    tpu.vector_store %arg4[%c0_68, %c0_69], %106 {strides = array<i32>} : memref<8x128xf32, #tpu.memory_space<vmem>>, vector<8x128xf32>,
    return
  }
  func.func @transform_0(%arg0: i32) -> (i32, i32) {
    %c0_i32 = arith.constant 0 : i32
    %c0_i32_0 = arith.constant 0 : i32
    return %arg0, %c0_i32 : i32, i32
  }
  func.func @transform_1(%arg0: i32) -> (i32, i32, i32) {
    %c0_i32 = arith.constant 0 : i32
    %c0_i32_0 = arith.constant 0 : i32
    %c0_i32_1 = arith.constant 0 : i32
    %c0_i32_2 = arith.constant 0 : i32
    return %c0_i32, %c0_i32_0, %c0_i32_1 : i32, i32, i32
  }
  func.func @transform_2(%arg0: i32) -> (i32, i32, i32) {
    %c0_i32 = arith.constant 0 : i32
    %c0_i32_0 = arith.constant 0 : i32
    %c0_i32_1 = arith.constant 0 : i32
    %c0_i32_2 = arith.constant 0 : i32
    return %c0_i32, %c0_i32_0, %c0_i32_1 : i32, i32, i32
  }
  func.func @transform_3(%arg0: i32) -> (i32, i32) {
    %c0_i32 = arith.constant 0 : i32
    %c0_i32_0 = arith.constant 0 : i32
    return %arg0, %c0_i32 : i32, i32
  }
}

</mosaic_0001>

<llo_original>
// kernel: tpu_custom_call.1
$region0: #{tpu_custom_call.1}
  #allocation0 [shape = 'u32[]', space=smem, size = 0x4, offset = 0x4, fixed_abs, tag = 'smem constant byte address 0x4 - core index']
  #allocation1 [shape = 'u32[144,128]{1,0:T(1,128)}', space=vmem, size = 0x12000, scoped, tag = 'internal scratch']
  %s0 = inlined_call_operand.hbm [shape: f32[8,128], index: 0, kind: input, shape index: {}]
  %s1 = inlined_call_operand.hbm [shape: f32[8,128,128], index: 1, kind: input, shape index: {}]
  %s2 = inlined_call_operand.hbm [shape: f32[8,1,128], index: 2, kind: input, shape index: {}]
  %s3 = inlined_call_operand.hbm [shape: f32[8,128], index: 3, kind: output, shape index: {}]
  %s4 = sld [smem:[#allocation0]]
  $region34: #{tpu_custom_call.1} parent=0
    _
  %s6 = ssub.s32 1, %s4
  %s7 = scalar_select 0, %s6, %s4
  $region1: #{tpu_custom_call.1} parent=0
    #allocation2 [shape = 'u8[4096]{0}', space=vmem, size = 0x1000, scoped, tag = 'input window, operand 0, single buffered']
    #allocation3 [shape = 's32[1]{0}', space=sflag, size = 0x4, scoped, tag = 'scoped memory for tpu_custom_call.1']
    #allocation4 [shape = 's32[1]{0}', space=sflag, size = 0x4, scoped, tag = 'scoped memory for tpu_custom_call.1']
    #allocation5 [shape = 'u8[524288]{0}', space=vmem, size = 0x80000, scoped, tag = 'input window, operand 1, single buffered']
    #allocation6 [shape = 's32[1]{0}', space=sflag, size = 0x4, scoped, tag = 'scoped memory for tpu_custom_call.1']
    #allocation7 [shape = 'u8[4096]{0}', space=vmem, size = 0x1000, scoped, tag = 'input window, operand 2, single buffered']
    #allocation8 [shape = 'u8[4096]{0}', space=vmem, size = 0x1000, scoped, tag = 'output window, operand 0, single buffered']
    %8 = vsyncpa [#allocation3], 0
    %9 = vsyncpa [#allocation6], 0
    %10 = vsyncpa [#allocation4], 0
    // Predicated region
    $region2: #{tpu_custom_call.1} parent=1 // pred_check
      _
    $region3: #{tpu_custom_call.1} parent=1 // pred_check_branch
      %12 = sbr.rel (0) target = $region5
    $region4: #{tpu_custom_call.1} parent=1 // pred_region
      %s14 = ssub.s32 128, 128
      %15 = vsyncadd [#allocation3], %s14
      %s17 = sshll.u32 [#allocation2], 4
      %s18 = int_to_ptr.vmem [resolvable:$true] %s17
      %20 = dma.hbm_to_vmem [thread:$0]  %s0, 128, %s18, [#allocation3]
    $region5: #{tpu_custom_call.1} parent=1 // pred_fallthru
      _
    // Predicated region
    $region6: #{tpu_custom_call.1} parent=1 // pred_check
      _
    $region7: #{tpu_custom_call.1} parent=1 // pred_check_branch
      %22 = sbr.rel (0) target = $region9
    $region8: #{tpu_custom_call.1} parent=1 // pred_region
      %s24 = ssub.s32 16384, 16384
      %25 = vsyncadd [#allocation6], %s24
      %s26 = sshll.u32 [#allocation5], 4
      %s27 = int_to_ptr.vmem [resolvable:$true] %s26
      %32 = dma.hbm_to_vmem [thread:$0]  %s1, 16384, %s27, [#allocation6], 128, 128, 8
    $region9: #{tpu_custom_call.1} parent=1 // pred_fallthru
      _
    // Predicated region
    $region10: #{tpu_custom_call.1} parent=1 // pred_check
      _
    $region11: #{tpu_custom_call.1} parent=1 // pred_check_branch
      %34 = sbr.rel (0) target = $region13
    $region12: #{tpu_custom_call.1} parent=1 // pred_region
      %s36 = ssub.s32 128, 128
      %37 = vsyncadd [#allocation6], %s36
      %s38 = sshll.u32 [#allocation7], 4
      %s39 = int_to_ptr.vmem [resolvable:$true] %s38
      %44 = dma.hbm_to_vmem [thread:$0]  %s2, 128, %s39, [#allocation6], 16, 16, 1
    $region13: #{tpu_custom_call.1} parent=1 // pred_fallthru
      _
    // Predicated region
    $region14: #{tpu_custom_call.1} parent=1 // pred_check
      _
    $region15: #{tpu_custom_call.1} parent=1 // pred_check_branch
      %46 = sbr.rel (0) target = $region17
    $region16: #{tpu_custom_call.1} parent=1 // pred_region
      %47 = dma.done [#allocation3], 128
    $region17: #{tpu_custom_call.1} parent=1 // pred_fallthru
      _
    // Predicated region
    $region18: #{tpu_custom_call.1} parent=1 // pred_check
      _
    $region19: #{tpu_custom_call.1} parent=1 // pred_check_branch
      %49 = sbr.rel (0) target = $region21
    $region20: #{tpu_custom_call.1} parent=1 // pred_region
      %50 = dma.done [#allocation6], 16384
    $region21: #{tpu_custom_call.1} parent=1 // pred_fallthru
      _
    // Predicated region
    $region22: #{tpu_custom_call.1} parent=1 // pred_check
      _
    $region23: #{tpu_custom_call.1} parent=1 // pred_check_branch
      %52 = sbr.rel (0) target = $region25
    $region24: #{tpu_custom_call.1} parent=1 // pred_region
      %53 = dma.done [#allocation6], 128
    $region25: #{tpu_custom_call.1} parent=1 // pred_fallthru
      _
    %v54 = vld [vmem:[#allocation2] sm:$0xff]
    %v55 = vmul.f32 %v54, %v54
    %56 = vadd.xlane.f32.xlu0 %v55
    %v57 = vpop.xlane.xlu0 %56
    %v58 = vmul.f32 %v57, 0.03125
    %v59 = vadd.f32 %v58, 1e-08
    %v60 = vrsqrt.pop %v59
    %v61 = vmul.f32 %v54, %v60
    %v62 = vld [vmem:[#allocation5] sm:$0xff]
    %v63 = vld [vmem:[#allocation5 + $0x8] sm:$0xff]
    %v64 = vld [vmem:[#allocation5 + $0x10] sm:$0xff]
    %v65 = vld [vmem:[#allocation5 + $0x18] sm:$0xff]
    %v66 = vld [vmem:[#allocation5 + $0x20] sm:$0xff]
    %v67 = vld [vmem:[#allocation5 + $0x28] sm:$0xff]
    %v68 = vld [vmem:[#allocation5 + $0x30] sm:$0xff]
    %v69 = vld [vmem:[#allocation5 + $0x38] sm:$0xff]
    %v70 = vld [vmem:[#allocation5 + $0x40] sm:$0xff]
    %v71 = vld [vmem:[#allocation5 + $0x48] sm:$0xff]
    %v72 = vld [vmem:[#allocation5 + $0x50] sm:$0xff]
    %v73 = vld [vmem:[#allocation5 + $0x58] sm:$0xff]
    %v74 = vld [vmem:[#allocation5 + $0x60] sm:$0xff]
    %v75 = vld [vmem:[#allocation5 + $0x68] sm:$0xff]
    %v76 = vld [vmem:[#allocation5 + $0x70] sm:$0xff]
    %v77 = vld [vmem:[#allocation5 + $0x78] sm:$0xff]
    %v78 = vld [vmem:[#allocation7] sm:$0x1]
    %v80 = vlaneseq
    %v81 = vshrl.u32 %v80, 7
    %v82 = vsub.s32 0, %v81
    %v83 = vrot.slane %v78, %v82
    %85 = vmatprep.subr.mxu0 0.0
    %86 = vmatpush1.msra.mxu0 %v77
    %87 = vmatprep.subr.mxu0 0.0
    %88 = vmatpush1.msra.mxu0 %v76
    %89 = vmatprep.subr.mxu0 0.0
    %90 = vmatpush1.msra.mxu0 %v75
    %91 = vmatprep.subr.mxu0 0.0
    %92 = vmatpush1.msra.mxu0 %v74
    %93 = vmatprep.subr.mxu0 0.0
    %94 = vmatpush1.msra.mxu0 %v73
    %95 = vmatprep.subr.mxu0 0.0
    %96 = vmatpush1.msra.mxu0 %v72
    %97 = vmatprep.subr.mxu0 0.0
    %98 = vmatpush1.msra.mxu0 %v71
    %99 = vmatprep.subr.mxu0 0.0
    %100 = vmatpush1.msra.mxu0 %v70
    %101 = vmatprep.subr.mxu0 0.0
    %102 = vmatpush1.msra.mxu0 %v69
    %103 = vmatprep.subr.mxu0 0.0
    %104 = vmatpush1.msra.mxu0 %v68
    %105 = vmatprep.subr.mxu0 0.0
    %106 = vmatpush1.msra.mxu0 %v67
    %107 = vmatprep.subr.mxu0 0.0
    %108 = vmatpush1.msra.mxu0 %v66
    %109 = vmatprep.subr.mxu0 0.0
    %110 = vmatpush1.msra.mxu0 %v65
    %111 = vmatprep.subr.mxu0 0.0
    %112 = vmatpush1.msra.mxu0 %v64
    %113 = vmatprep.subr.mxu0 0.0
    %114 = vmatpush1.msra.mxu0 %v63
    %115 = vmatprep.subr.mxu0 0.0
    %116 = vmatpush1.msra.mxu0 %v62
    %117 = vmatprep.subr.mxu0 0.0
    %118 = vmatpush2.msra.mxu0 0.0
    %119 = vmatprep.subr.mxu0 0.0
    %120 = vmatpush2.msra.mxu0 0.0
    %121 = vmatprep.subr.mxu0 0.0
    %122 = vmatpush2.msra.mxu0 0.0
    %123 = vmatprep.subr.mxu0 0.0
    %124 = vmatpush2.msra.mxu0 0.0
    %125 = vmatprep.subr.mxu0 0.0
    %126 = vmatpush2.msra.mxu0 0.0
    %127 = vmatprep.subr.mxu0 0.0
    %128 = vmatpush2.msra.mxu0 0.0
    %129 = vmatprep.subr.mxu0 0.0
    %130 = vmatpush2.msra.mxu0 0.0
    %131 = vmatprep.subr.mxu0 0.0
    %132 = vmatpush2.msra.mxu0 0.0
    %133 = vmatprep.subr.mxu0 0.0
    %134 = vmatpush2.msra.mxu0 0.0
    %135 = vmatprep.subr.mxu0 0.0
    %136 = vmatpush2.msra.mxu0 0.0
    %137 = vmatprep.subr.mxu0 0.0
    %138 = vmatpush2.msra.mxu0 0.0
    %139 = vmatprep.subr.mxu0 0.0
    %140 = vmatpush2.msra.mxu0 0.0
    %141 = vmatprep.subr.mxu0 0.0
    %142 = vmatpush2.msra.mxu0 0.0
    %143 = vmatprep.subr.mxu0 0.0
    %144 = vmatpush2.msra.mxu0 0.0
    %145 = vmatprep.subr.mxu0 0.0
    %146 = vmatpush2.msra.mxu0 0.0
    %147 = vmatprep.subr.mxu0 0.0
    %148 = vmatpush2.msra.mxu0 0.0
    %149 = vmatprep.mubr.f32.mxu0 0.0
    %150 = vmatmul.mubr.f32.gmra.mxu0 %v61
    %v151 = vpop.f32.mrf.mxu0
    %v152 = vadd.f32 %v83, %v151
    %v153 = vpop.f32.mrf.mxu0
    %154 = vdwg.mxu0
    %vm155 = vcmp.gt.f32.partialorder %v152, 0.0
    %v156 = vmul.f32 %v152, 0.2
    %v157 = vsel %vm155, %v152, %v156
    %s158 = scalar_lea.vmem [#allocation5], 128
    %v159 = vld [vmem:[%s158] sm:$0xff]
    %v160 = vld [vmem:[%s158 + $0x8] sm:$0xff]
    %v161 = vld [vmem:[%s158 + $0x10] sm:$0xff]
    %v162 = vld [vmem:[%s158 + $0x18] sm:$0xff]
    %v163 = vld [vmem:[%s158 + $0x20] sm:$0xff]
    %v164 = vld [vmem:[%s158 + $0x28] sm:$0xff]
    %v165 = vld [vmem:[%s158 + $0x30] sm:$0xff]
    %v166 = vld [vmem:[%s158 + $0x38] sm:$0xff]
    %v167 = vld [vmem:[%s158 + $0x40] sm:$0xff]
    %v168 = vld [vmem:[%s158 + $0x48] sm:$0xff]
    %v169 = vld [vmem:[%s158 + $0x50] sm:$0xff]
    %v170 = vld [vmem:[%s158 + $0x58] sm:$0xff]
    %v171 = vld [vmem:[%s158 + $0x60] sm:$0xff]
    %v172 = vld [vmem:[%s158 + $0x68] sm:$0xff]
    %v173 = vld [vmem:[%s158 + $0x70] sm:$0xff]
    %v174 = vld [vmem:[%s158 + $0x78] sm:$0xff]
    %s175 = scalar_lea.vmem [#allocation7], 1
    %v176 = vld [vmem:[%s175] sm:$0x1]
    %v178 = vlaneseq
    %v179 = vshrl.u32 %v178, 7
    %v180 = vsub.s32 0, %v179
    %v181 = vrot.slane %v176, %v180
    %183 = vmatprep.subr.mxu0 0.0
    %184 = vmatpush1.msra.mxu0 %v174
    %185 = vmatprep.subr.mxu0 0.0
    %186 = vmatpush1.msra.mxu0 %v173
    %187 = vmatprep.subr.mxu0 0.0
    %188 = vmatpush1.msra.mxu0 %v172
    %189 = vmatprep.subr.mxu0 0.0
    %190 = vmatpush1.msra.mxu0 %v171
    %191 = vmatprep.subr.mxu0 0.0
    %192 = vmatpush1.msra.mxu0 %v170
    %193 = vmatprep.subr.mxu0 0.0
    %194 = vmatpush1.msra.mxu0 %v169
    %195 = vmatprep.subr.mxu0 0.0
    %196 = vmatpush1.msra.mxu0 %v168
    %197 = vmatprep.subr.mxu0 0.0
    %198 = vmatpush1.msra.mxu0 %v167
    %199 = vmatprep.subr.mxu0 0.0
    %200 = vmatpush1.msra.mxu0 %v166
    %201 = vmatprep.subr.mxu0 0.0
    %202 = vmatpush1.msra.mxu0 %v165
    %203 = vmatprep.subr.mxu0 0.0
    %204 = vmatpush1.msra.mxu0 %v164
    %205 = vmatprep.subr.mxu0 0.0
    %206 = vmatpush1.msra.mxu0 %v163
    %207 = vmatprep.subr.mxu0 0.0
    %208 = vmatpush1.msra.mxu0 %v162
    %209 = vmatprep.subr.mxu0 0.0
    %210 = vmatpush1.msra.mxu0 %v161
    %211 = vmatprep.subr.mxu0 0.0
    %212 = vmatpush1.msra.mxu0 %v160
    %213 = vmatprep.subr.mxu0 0.0
    %214 = vmatpush1.msra.mxu0 %v159
    %215 = vmatprep.subr.mxu0 0.0
    %216 = vmatpush2.msra.mxu0 0.0
    %217 = vmatprep.subr.mxu0 0.0
    %218 = vmatpush2.msra.mxu0 0.0
    %219 = vmatprep.subr.mxu0 0.0
    %220 = vmatpush2.msra.mxu0 0.0
    %221 = vmatprep.subr.mxu0 0.0
    %222 = vmatpush2.msra.mxu0 0.0
    %223 = vmatprep.subr.mxu0 0.0
    %224 = vmatpush2.msra.mxu0 0.0
    %225 = vmatprep.subr.mxu0 0.0
    %226 = vmatpush2.msra.mxu0 0.0
    %227 = vmatprep.subr.mxu0 0.0
    %228 = vmatpush2.msra.mxu0 0.0
    %229 = vmatprep.subr.mxu0 0.0
    %230 = vmatpush2.msra.mxu0 0.0
    %231 = vmatprep.subr.mxu0 0.0
    %232 = vmatpush2.msra.mxu0 0.0
    %233 = vmatprep.subr.mxu0 0.0
    %234 = vmatpush2.msra.mxu0 0.0
    %235 = vmatprep.subr.mxu0 0.0
    %236 = vmatpush2.msra.mxu0 0.0
    %237 = vmatprep.subr.mxu0 0.0
    %238 = vmatpush2.msra.mxu0 0.0
    %239 = vmatprep.subr.mxu0 0.0
    %240 = vmatpush2.msra.mxu0 0.0
    %241 = vmatprep.subr.mxu0 0.0
    %242 = vmatpush2.msra.mxu0 0.0
    %243 = vmatprep.subr.mxu0 0.0
    %244 = vmatpush2.msra.mxu0 0.0
    %245 = vmatprep.subr.mxu0 0.0
    %246 = vmatpush2.msra.mxu0 0.0
    %247 = vmatprep.mubr.f32.mxu0 0.0
    %248 = vmatmul.mubr.f32.gmra.mxu0 %v157
    %v249 = vpop.f32.mrf.mxu0
    %v250 = vadd.f32 %v181, %v249
    %v251 = vpop.f32.mrf.mxu0
    %252 = vdwg.mxu0
    %vm253 = vcmp.gt.f32.partialorder %v250, 0.0
    %v254 = vmul.f32 %v250, 0.2
    %v255 = vsel %vm253, %v250, %v254
    %s256 = scalar_lea.vmem [#allocation5], 256
    %v257 = vld [vmem:[%s256] sm:$0xff]
    %v258 = vld [vmem:[%s256 + $0x8] sm:$0xff]
    %v259 = vld [vmem:[%s256 + $0x10] sm:$0xff]
    %v260 = vld [vmem:[%s256 + $0x18] sm:$0xff]
    %v261 = vld [vmem:[%s256 + $0x20] sm:$0xff]
    %v262 = vld [vmem:[%s256 + $0x28] sm:$0xff]
    %v263 = vld [vmem:[%s256 + $0x30] sm:$0xff]
    %v264 = vld [vmem:[%s256 + $0x38] sm:$0xff]
    %v265 = vld [vmem:[%s256 + $0x40] sm:$0xff]
    %v266 = vld [vmem:[%s256 + $0x48] sm:$0xff]
    %v267 = vld [vmem:[%s256 + $0x50] sm:$0xff]
    %v268 = vld [vmem:[%s256 + $0x58] sm:$0xff]
    %v269 = vld [vmem:[%s256 + $0x60] sm:$0xff]
    %v270 = vld [vmem:[%s256 + $0x68] sm:$0xff]
    %v271 = vld [vmem:[%s256 + $0x70] sm:$0xff]
    %v272 = vld [vmem:[%s256 + $0x78] sm:$0xff]
    %s273 = scalar_lea.vmem [#allocation7], 2
    %v274 = vld [vmem:[%s273] sm:$0x1]
    %v276 = vlaneseq
    %v277 = vshrl.u32 %v276, 7
    %v278 = vsub.s32 0, %v277
    %v279 = vrot.slane %v274, %v278
    %281 = vmatprep.subr.mxu0 0.0
    %282 = vmatpush1.msra.mxu0 %v272
    %283 = vmatprep.subr.mxu0 0.0
    %284 = vmatpush1.msra.mxu0 %v271
    %285 = vmatprep.subr.mxu0 0.0
    %286 = vmatpush1.msra.mxu0 %v270
    %287 = vmatprep.subr.mxu0 0.0
    %288 = vmatpush1.msra.mxu0 %v269
    %289 = vmatprep.subr.mxu0 0.0
    %290 = vmatpush1.msra.mxu0 %v268
    %291 = vmatprep.subr.mxu0 0.0
    %292 = vmatpush1.msra.mxu0 %v267
    %293 = vmatprep.subr.mxu0 0.0
    %294 = vmatpush1.msra.mxu0 %v266
    %295 = vmatprep.subr.mxu0 0.0
    %296 = vmatpush1.msra.mxu0 %v265
    %297 = vmatprep.subr.mxu0 0.0
    %298 = vmatpush1.msra.mxu0 %v264
    %299 = vmatprep.subr.mxu0 0.0
    %300 = vmatpush1.msra.mxu0 %v263
    %301 = vmatprep.subr.mxu0 0.0
    %302 = vmatpush1.msra.mxu0 %v262
    %303 = vmatprep.subr.mxu0 0.0
    %304 = vmatpush1.msra.mxu0 %v261
    %305 = vmatprep.subr.mxu0 0.0
    %306 = vmatpush1.msra.mxu0 %v260
    %307 = vmatprep.subr.mxu0 0.0
    %308 = vmatpush1.msra.mxu0 %v259
    %309 = vmatprep.subr.mxu0 0.0
    %310 = vmatpush1.msra.mxu0 %v258
    %311 = vmatprep.subr.mxu0 0.0
    %312 = vmatpush1.msra.mxu0 %v257
    %313 = vmatprep.subr.mxu0 0.0
    %314 = vmatpush2.msra.mxu0 0.0
    %315 = vmatprep.subr.mxu0 0.0
    %316 = vmatpush2.msra.mxu0 0.0
    %317 = vmatprep.subr.mxu0 0.0
    %318 = vmatpush2.msra.mxu0 0.0
    %319 = vmatprep.subr.mxu0 0.0
    %320 = vmatpush2.msra.mxu0 0.0
    %321 = vmatprep.subr.mxu0 0.0
    %322 = vmatpush2.msra.mxu0 0.0
    %323 = vmatprep.subr.mxu0 0.0
    %324 = vmatpush2.msra.mxu0 0.0
    %325 = vmatprep.subr.mxu0 0.0
    %326 = vmatpush2.msra.mxu0 0.0
    %327 = vmatprep.subr.mxu0 0.0
    %328 = vmatpush2.msra.mxu0 0.0
    %329 = vmatprep.subr.mxu0 0.0
    %330 = vmatpush2.msra.mxu0 0.0
    %331 = vmatprep.subr.mxu0 0.0
    %332 = vmatpush2.msra.mxu0 0.0
    %333 = vmatprep.subr.mxu0 0.0
    %334 = vmatpush2.msra.mxu0 0.0
    %335 = vmatprep.subr.mxu0 0.0
    %336 = vmatpush2.msra.mxu0 0.0
    %337 = vmatprep.subr.mxu0 0.0
    %338 = vmatpush2.msra.mxu0 0.0
    %339 = vmatprep.subr.mxu0 0.0
    %340 = vmatpush2.msra.mxu0 0.0
    %341 = vmatprep.subr.mxu0 0.0
    %342 = vmatpush2.msra.mxu0 0.0
    %343 = vmatprep.subr.mxu0 0.0
    %344 = vmatpush2.msra.mxu0 0.0
    %345 = vmatprep.mubr.f32.mxu0 0.0
    %346 = vmatmul.mubr.f32.gmra.mxu0 %v255
    %v347 = vpop.f32.mrf.mxu0
    %v348 = vadd.f32 %v279, %v347
    %v349 = vpop.f32.mrf.mxu0
    %350 = vdwg.mxu0
    %vm351 = vcmp.gt.f32.partialorder %v348, 0.0
    %v352 = vmul.f32 %v348, 0.2
    %v353 = vsel %vm351, %v348, %v352
    %s354 = scalar_lea.vmem [#allocation5], 384
    %v355 = vld [vmem:[%s354] sm:$0xff]
    %v356 = vld [vmem:[%s354 + $0x8] sm:$0xff]
    %v357 = vld [vmem:[%s354 + $0x10] sm:$0xff]
    %v358 = vld [vmem:[%s354 + $0x18] sm:$0xff]
    %v359 = vld [vmem:[%s354 + $0x20] sm:$0xff]
    %v360 = vld [vmem:[%s354 + $0x28] sm:$0xff]
    %v361 = vld [vmem:[%s354 + $0x30] sm:$0xff]
    %v362 = vld [vmem:[%s354 + $0x38] sm:$0xff]
    %v363 = vld [vmem:[%s354 + $0x40] sm:$0xff]
    %v364 = vld [vmem:[%s354 + $0x48] sm:$0xff]
    %v365 = vld [vmem:[%s354 + $0x50] sm:$0xff]
    %v366 = vld [vmem:[%s354 + $0x58] sm:$0xff]
    %v367 = vld [vmem:[%s354 + $0x60] sm:$0xff]
    %v368 = vld [vmem:[%s354 + $0x68] sm:$0xff]
    %v369 = vld [vmem:[%s354 + $0x70] sm:$0xff]
    %v370 = vld [vmem:[%s354 + $0x78] sm:$0xff]
    %s371 = scalar_lea.vmem [#allocation7], 3
    %v372 = vld [vmem:[%s371] sm:$0x1]
    %v374 = vlaneseq
    %v375 = vshrl.u32 %v374, 7
    %v376 = vsub.s32 0, %v375
    %v377 = vrot.slane %v372, %v376
    %379 = vmatprep.subr.mxu0 0.0
    %380 = vmatpush1.msra.mxu0 %v370
    %381 = vmatprep.subr.mxu0 0.0
    %382 = vmatpush1.msra.mxu0 %v369
    %383 = vmatprep.subr.mxu0 0.0
    %384 = vmatpush1.msra.mxu0 %v368
    %385 = vmatprep.subr.mxu0 0.0
    %386 = vmatpush1.msra.mxu0 %v367
    %387 = vmatprep.subr.mxu0 0.0
    %388 = vmatpush1.msra.mxu0 %v366
    %389 = vmatprep.subr.mxu0 0.0
    %390 = vmatpush1.msra.mxu0 %v365
    %391 = vmatprep.subr.mxu0 0.0
    %392 = vmatpush1.msra.mxu0 %v364
    %393 = vmatprep.subr.mxu0 0.0
    %394 = vmatpush1.msra.mxu0 %v363
    %395 = vmatprep.subr.mxu0 0.0
    %396 = vmatpush1.msra.mxu0 %v362
    %397 = vmatprep.subr.mxu0 0.0
    %398 = vmatpush1.msra.mxu0 %v361
    %399 = vmatprep.subr.mxu0 0.0
    %400 = vmatpush1.msra.mxu0 %v360
    %401 = vmatprep.subr.mxu0 0.0
    %402 = vmatpush1.msra.mxu0 %v359
    %403 = vmatprep.subr.mxu0 0.0
    %404 = vmatpush1.msra.mxu0 %v358
    %405 = vmatprep.subr.mxu0 0.0
    %406 = vmatpush1.msra.mxu0 %v357
    %407 = vmatprep.subr.mxu0 0.0
    %408 = vmatpush1.msra.mxu0 %v356
    %409 = vmatprep.subr.mxu0 0.0
    %410 = vmatpush1.msra.mxu0 %v355
    %411 = vmatprep.subr.mxu0 0.0
    %412 = vmatpush2.msra.mxu0 0.0
    %413 = vmatprep.subr.mxu0 0.0
    %414 = vmatpush2.msra.mxu0 0.0
    %415 = vmatprep.subr.mxu0 0.0
    %416 = vmatpush2.msra.mxu0 0.0
    %417 = vmatprep.subr.mxu0 0.0
    %418 = vmatpush2.msra.mxu0 0.0
    %419 = vmatprep.subr.mxu0 0.0
    %420 = vmatpush2.msra.mxu0 0.0
    %421 = vmatprep.subr.mxu0 0.0
    %422 = vmatpush2.msra.mxu0 0.0
    %423 = vmatprep.subr.mxu0 0.0
    %424 = vmatpush2.msra.mxu0 0.0
    %425 = vmatprep.subr.mxu0 0.0
    %426 = vmatpush2.msra.mxu0 0.0
    %427 = vmatprep.subr.mxu0 0.0
    %428 = vmatpush2.msra.mxu0 0.0
    %429 = vmatprep.subr.mxu0 0.0
    %430 = vmatpush2.msra.mxu0 0.0
    %431 = vmatprep.subr.mxu0 0.0
    %432 = vmatpush2.msra.mxu0 0.0
    %433 = vmatprep.subr.mxu0 0.0
    %434 = vmatpush2.msra.mxu0 0.0
    %435 = vmatprep.subr.mxu0 0.0
    %436 = vmatpush2.msra.mxu0 0.0
    %437 = vmatprep.subr.mxu0 0.0
    %438 = vmatpush2.msra.mxu0 0.0
    %439 = vmatprep.subr.mxu0 0.0
    %440 = vmatpush2.msra.mxu0 0.0
    %441 = vmatprep.subr.mxu0 0.0
    %442 = vmatpush2.msra.mxu0 0.0
    %443 = vmatprep.mubr.f32.mxu0 0.0
    %444 = vmatmul.mubr.f32.gmra.mxu0 %v353
    %v445 = vpop.f32.mrf.mxu0
    %v446 = vadd.f32 %v377, %v445
    %v447 = vpop.f32.mrf.mxu0
    %448 = vdwg.mxu0
    %vm449 = vcmp.gt.f32.partialorder %v446, 0.0
    %v450 = vmul.f32 %v446, 0.2
    %v451 = vsel %vm449, %v446, %v450
    %s452 = scalar_lea.vmem [#allocation5], 512
    %v453 = vld [vmem:[%s452] sm:$0xff]
    %v454 = vld [vmem:[%s452 + $0x8] sm:$0xff]
    %v455 = vld [vmem:[%s452 + $0x10] sm:$0xff]
    %v456 = vld [vmem:[%s452 + $0x18] sm:$0xff]
    %v457 = vld [vmem:[%s452 + $0x20] sm:$0xff]
    %v458 = vld [vmem:[%s452 + $0x28] sm:$0xff]
    %v459 = vld [vmem:[%s452 + $0x30] sm:$0xff]
    %v460 = vld [vmem:[%s452 + $0x38] sm:$0xff]
    %v461 = vld [vmem:[%s452 + $0x40] sm:$0xff]
    %v462 = vld [vmem:[%s452 + $0x48] sm:$0xff]
    %v463 = vld [vmem:[%s452 + $0x50] sm:$0xff]
    %v464 = vld [vmem:[%s452 + $0x58] sm:$0xff]
    %v465 = vld [vmem:[%s452 + $0x60] sm:$0xff]
    %v466 = vld [vmem:[%s452 + $0x68] sm:$0xff]
    %v467 = vld [vmem:[%s452 + $0x70] sm:$0xff]
    %v468 = vld [vmem:[%s452 + $0x78] sm:$0xff]
    %s469 = scalar_lea.vmem [#allocation7], 4
    %v470 = vld [vmem:[%s469] sm:$0x1]
    %v472 = vlaneseq
    %v473 = vshrl.u32 %v472, 7
    %v474 = vsub.s32 0, %v473
    %v475 = vrot.slane %v470, %v474
    %477 = vmatprep.subr.mxu0 0.0
    %478 = vmatpush1.msra.mxu0 %v468
    %479 = vmatprep.subr.mxu0 0.0
    %480 = vmatpush1.msra.mxu0 %v467
    %481 = vmatprep.subr.mxu0 0.0
    %482 = vmatpush1.msra.mxu0 %v466
    %483 = vmatprep.subr.mxu0 0.0
    %484 = vmatpush1.msra.mxu0 %v465
    %485 = vmatprep.subr.mxu0 0.0
    %486 = vmatpush1.msra.mxu0 %v464
    %487 = vmatprep.subr.mxu0 0.0
    %488 = vmatpush1.msra.mxu0 %v463
    %489 = vmatprep.subr.mxu0 0.0
    %490 = vmatpush1.msra.mxu0 %v462
    %491 = vmatprep.subr.mxu0 0.0
    %492 = vmatpush1.msra.mxu0 %v461
    %493 = vmatprep.subr.mxu0 0.0
    %494 = vmatpush1.msra.mxu0 %v460
    %495 = vmatprep.subr.mxu0 0.0
    %496 = vmatpush1.msra.mxu0 %v459
    %497 = vmatprep.subr.mxu0 0.0
    %498 = vmatpush1.msra.mxu0 %v458
    %499 = vmatprep.subr.mxu0 0.0
    %500 = vmatpush1.msra.mxu0 %v457
    %501 = vmatprep.subr.mxu0 0.0
    %502 = vmatpush1.msra.mxu0 %v456
    %503 = vmatprep.subr.mxu0 0.0
    %504 = vmatpush1.msra.mxu0 %v455
    %505 = vmatprep.subr.mxu0 0.0
    %506 = vmatpush1.msra.mxu0 %v454
    %507 = vmatprep.subr.mxu0 0.0
    %508 = vmatpush1.msra.mxu0 %v453
    %509 = vmatprep.subr.mxu0 0.0
    %510 = vmatpush2.msra.mxu0 0.0
    %511 = vmatprep.subr.mxu0 0.0
    %512 = vmatpush2.msra.mxu0 0.0
    %513 = vmatprep.subr.mxu0 0.0
    %514 = vmatpush2.msra.mxu0 0.0
    %515 = vmatprep.subr.mxu0 0.0
    %516 = vmatpush2.msra.mxu0 0.0
    %517 = vmatprep.subr.mxu0 0.0
    %518 = vmatpush2.msra.mxu0 0.0
    %519 = vmatprep.subr.mxu0 0.0
    %520 = vmatpush2.msra.mxu0 0.0
    %521 = vmatprep.subr.mxu0 0.0
    %522 = vmatpush2.msra.mxu0 0.0
    %523 = vmatprep.subr.mxu0 0.0
    %524 = vmatpush2.msra.mxu0 0.0
    %525 = vmatprep.subr.mxu0 0.0
    %526 = vmatpush2.msra.mxu0 0.0
    %527 = vmatprep.subr.mxu0 0.0
    %528 = vmatpush2.msra.mxu0 0.0
    %529 = vmatprep.subr.mxu0 0.0
    %530 = vmatpush2.msra.mxu0 0.0
    %531 = vmatprep.subr.mxu0 0.0
    %532 = vmatpush2.msra.mxu0 0.0
    %533 = vmatprep.subr.mxu0 0.0
    %534 = vmatpush2.msra.mxu0 0.0
    %535 = vmatprep.subr.mxu0 0.0
    %536 = vmatpush2.msra.mxu0 0.0
    %537 = vmatprep.subr.mxu0 0.0
    %538 = vmatpush2.msra.mxu0 0.0
    %539 = vmatprep.subr.mxu0 0.0
    %540 = vmatpush2.msra.mxu0 0.0
    %541 = vmatprep.mubr.f32.mxu0 0.0
    %542 = vmatmul.mubr.f32.gmra.mxu0 %v451
    %v543 = vpop.f32.mrf.mxu0
    %v544 = vadd.f32 %v475, %v543
    %v545 = vpop.f32.mrf.mxu0
    %546 = vdwg.mxu0
    %vm547 = vcmp.gt.f32.partialorder %v544, 0.0
    %v548 = vmul.f32 %v544, 0.2
    %v549 = vsel %vm547, %v544, %v548
    %s550 = scalar_lea.vmem [#allocation5], 640
    %v551 = vld [vmem:[%s550] sm:$0xff]
    %v552 = vld [vmem:[%s550 + $0x8] sm:$0xff]
    %v553 = vld [vmem:[%s550 + $0x10] sm:$0xff]
    %v554 = vld [vmem:[%s550 + $0x18] sm:$0xff]
    %v555 = vld [vmem:[%s550 + $0x20] sm:$0xff]
    %v556 = vld [vmem:[%s550 + $0x28] sm:$0xff]
    %v557 = vld [vmem:[%s550 + $0x30] sm:$0xff]
    %v558 = vld [vmem:[%s550 + $0x38] sm:$0xff]
    %v559 = vld [vmem:[%s550 + $0x40] sm:$0xff]
    %v560 = vld [vmem:[%s550 + $0x48] sm:$0xff]
    %v561 = vld [vmem:[%s550 + $0x50] sm:$0xff]
    %v562 = vld [vmem:[%s550 + $0x58] sm:$0xff]
    %v563 = vld [vmem:[%s550 + $0x60] sm:$0xff]
    %v564 = vld [vmem:[%s550 + $0x68] sm:$0xff]
    %v565 = vld [vmem:[%s550 + $0x70] sm:$0xff]
    %v566 = vld [vmem:[%s550 + $0x78] sm:$0xff]
    %s567 = scalar_lea.vmem [#allocation7], 5
    %v568 = vld [vmem:[%s567] sm:$0x1]
    %v570 = vlaneseq
    %v571 = vshrl.u32 %v570, 7
    %v572 = vsub.s32 0, %v571
    %v573 = vrot.slane %v568, %v572
    %575 = vmatprep.subr.mxu0 0.0
    %576 = vmatpush1.msra.mxu0 %v566
    %577 = vmatprep.subr.mxu0 0.0
    %578 = vmatpush1.msra.mxu0 %v565
    %579 = vmatprep.subr.mxu0 0.0
    %580 = vmatpush1.msra.mxu0 %v564
    %581 = vmatprep.subr.mxu0 0.0
    %582 = vmatpush1.msra.mxu0 %v563
    %583 = vmatprep.subr.mxu0 0.0
    %584 = vmatpush1.msra.mxu0 %v562
    %585 = vmatprep.subr.mxu0 0.0
    %586 = vmatpush1.msra.mxu0 %v561
    %587 = vmatprep.subr.mxu0 0.0
    %588 = vmatpush1.msra.mxu0 %v560
    %589 = vmatprep.subr.mxu0 0.0
    %590 = vmatpush1.msra.mxu0 %v559
    %591 = vmatprep.subr.mxu0 0.0
    %592 = vmatpush1.msra.mxu0 %v558
    %593 = vmatprep.subr.mxu0 0.0
    %594 = vmatpush1.msra.mxu0 %v557
    %595 = vmatprep.subr.mxu0 0.0
    %596 = vmatpush1.msra.mxu0 %v556
    %597 = vmatprep.subr.mxu0 0.0
    %598 = vmatpush1.msra.mxu0 %v555
    %599 = vmatprep.subr.mxu0 0.0
    %600 = vmatpush1.msra.mxu0 %v554
    %601 = vmatprep.subr.mxu0 0.0
    %602 = vmatpush1.msra.mxu0 %v553
    %603 = vmatprep.subr.mxu0 0.0
    %604 = vmatpush1.msra.mxu0 %v552
    %605 = vmatprep.subr.mxu0 0.0
    %606 = vmatpush1.msra.mxu0 %v551
    %607 = vmatprep.subr.mxu0 0.0
    %608 = vmatpush2.msra.mxu0 0.0
    %609 = vmatprep.subr.mxu0 0.0
    %610 = vmatpush2.msra.mxu0 0.0
    %611 = vmatprep.subr.mxu0 0.0
    %612 = vmatpush2.msra.mxu0 0.0
    %613 = vmatprep.subr.mxu0 0.0
    %614 = vmatpush2.msra.mxu0 0.0
    %615 = vmatprep.subr.mxu0 0.0
    %616 = vmatpush2.msra.mxu0 0.0
    %617 = vmatprep.subr.mxu0 0.0
    %618 = vmatpush2.msra.mxu0 0.0
    %619 = vmatprep.subr.mxu0 0.0
    %620 = vmatpush2.msra.mxu0 0.0
    %621 = vmatprep.subr.mxu0 0.0
    %622 = vmatpush2.msra.mxu0 0.0
    %623 = vmatprep.subr.mxu0 0.0
    %624 = vmatpush2.msra.mxu0 0.0
    %625 = vmatprep.subr.mxu0 0.0
    %626 = vmatpush2.msra.mxu0 0.0
    %627 = vmatprep.subr.mxu0 0.0
    %628 = vmatpush2.msra.mxu0 0.0
    %629 = vmatprep.subr.mxu0 0.0
    %630 = vmatpush2.msra.mxu0 0.0
    %631 = vmatprep.subr.mxu0 0.0
    %632 = vmatpush2.msra.mxu0 0.0
    %633 = vmatprep.subr.mxu0 0.0
    %634 = vmatpush2.msra.mxu0 0.0
    %635 = vmatprep.subr.mxu0 0.0
    %636 = vmatpush2.msra.mxu0 0.0
    %637 = vmatprep.subr.mxu0 0.0
    %638 = vmatpush2.msra.mxu0 0.0
    %639 = vmatprep.mubr.f32.mxu0 0.0
    %640 = vmatmul.mubr.f32.gmra.mxu0 %v549
    %v641 = vpop.f32.mrf.mxu0
    %v642 = vadd.f32 %v573, %v641
    %v643 = vpop.f32.mrf.mxu0
    %644 = vdwg.mxu0
    %vm645 = vcmp.gt.f32.partialorder %v642, 0.0
    %v646 = vmul.f32 %v642, 0.2
    %v647 = vsel %vm645, %v642, %v646
    %s648 = scalar_lea.vmem [#allocation5], 768
    %v649 = vld [vmem:[%s648] sm:$0xff]
    %v650 = vld [vmem:[%s648 + $0x8] sm:$0xff]
    %v651 = vld [vmem:[%s648 + $0x10] sm:$0xff]
    %v652 = vld [vmem:[%s648 + $0x18] sm:$0xff]
    %v653 = vld [vmem:[%s648 + $0x20] sm:$0xff]
    %v654 = vld [vmem:[%s648 + $0x28] sm:$0xff]
    %v655 = vld [vmem:[%s648 + $0x30] sm:$0xff]
    %v656 = vld [vmem:[%s648 + $0x38] sm:$0xff]
    %v657 = vld [vmem:[%s648 + $0x40] sm:$0xff]
    %v658 = vld [vmem:[%s648 + $0x48] sm:$0xff]
    %v659 = vld [vmem:[%s648 + $0x50] sm:$0xff]
    %v660 = vld [vmem:[%s648 + $0x58] sm:$0xff]
    %v661 = vld [vmem:[%s648 + $0x60] sm:$0xff]
    %v662 = vld [vmem:[%s648 + $0x68] sm:$0xff]
    %v663 = vld [vmem:[%s648 + $0x70] sm:$0xff]
    %v664 = vld [vmem:[%s648 + $0x78] sm:$0xff]
    %s665 = scalar_lea.vmem [#allocation7], 6
    %v666 = vld [vmem:[%s665] sm:$0x1]
    %v668 = vlaneseq
    %v669 = vshrl.u32 %v668, 7
    %v670 = vsub.s32 0, %v669
    %v671 = vrot.slane %v666, %v670
    %673 = vmatprep.subr.mxu0 0.0
    %674 = vmatpush1.msra.mxu0 %v664
    %675 = vmatprep.subr.mxu0 0.0
    %676 = vmatpush1.msra.mxu0 %v663
    %677 = vmatprep.subr.mxu0 0.0
    %678 = vmatpush1.msra.mxu0 %v662
    %679 = vmatprep.subr.mxu0 0.0
    %680 = vmatpush1.msra.mxu0 %v661
    %681 = vmatprep.subr.mxu0 0.0
    %682 = vmatpush1.msra.mxu0 %v660
    %683 = vmatprep.subr.mxu0 0.0
    %684 = vmatpush1.msra.mxu0 %v659
    %685 = vmatprep.subr.mxu0 0.0
    %686 = vmatpush1.msra.mxu0 %v658
    %687 = vmatprep.subr.mxu0 0.0
    %688 = vmatpush1.msra.mxu0 %v657
    %689 = vmatprep.subr.mxu0 0.0
    %690 = vmatpush1.msra.mxu0 %v656
    %691 = vmatprep.subr.mxu0 0.0
    %692 = vmatpush1.msra.mxu0 %v655
    %693 = vmatprep.subr.mxu0 0.0
    %694 = vmatpush1.msra.mxu0 %v654
    %695 = vmatprep.subr.mxu0 0.0
    %696 = vmatpush1.msra.mxu0 %v653
    %697 = vmatprep.subr.mxu0 0.0
    %698 = vmatpush1.msra.mxu0 %v652
    %699 = vmatprep.subr.mxu0 0.0
    %700 = vmatpush1.msra.mxu0 %v651
    %701 = vmatprep.subr.mxu0 0.0
    %702 = vmatpush1.msra.mxu0 %v650
    %703 = vmatprep.subr.mxu0 0.0
    %704 = vmatpush1.msra.mxu0 %v649
    %705 = vmatprep.subr.mxu0 0.0
    %706 = vmatpush2.msra.mxu0 0.0
    %707 = vmatprep.subr.mxu0 0.0
    %708 = vmatpush2.msra.mxu0 0.0
    %709 = vmatprep.subr.mxu0 0.0
    %710 = vmatpush2.msra.mxu0 0.0
    %711 = vmatprep.subr.mxu0 0.0
    %712 = vmatpush2.msra.mxu0 0.0
    %713 = vmatprep.subr.mxu0 0.0
    %714 = vmatpush2.msra.mxu0 0.0
    %715 = vmatprep.subr.mxu0 0.0
    %716 = vmatpush2.msra.mxu0 0.0
    %717 = vmatprep.subr.mxu0 0.0
    %718 = vmatpush2.msra.mxu0 0.0
    %719 = vmatprep.subr.mxu0 0.0
    %720 = vmatpush2.msra.mxu0 0.0
    %721 = vmatprep.subr.mxu0 0.0
    %722 = vmatpush2.msra.mxu0 0.0
    %723 = vmatprep.subr.mxu0 0.0
    %724 = vmatpush2.msra.mxu0 0.0
    %725 = vmatprep.subr.mxu0 0.0
    %726 = vmatpush2.msra.mxu0 0.0
    %727 = vmatprep.subr.mxu0 0.0
    %728 = vmatpush2.msra.mxu0 0.0
    %729 = vmatprep.subr.mxu0 0.0
    %730 = vmatpush2.msra.mxu0 0.0
    %731 = vmatprep.subr.mxu0 0.0
    %732 = vmatpush2.msra.mxu0 0.0
    %733 = vmatprep.subr.mxu0 0.0
    %734 = vmatpush2.msra.mxu0 0.0
    %735 = vmatprep.subr.mxu0 0.0
    %736 = vmatpush2.msra.mxu0 0.0
    %737 = vmatprep.mubr.f32.mxu0 0.0
    %738 = vmatmul.mubr.f32.gmra.mxu0 %v647
    %v739 = vpop.f32.mrf.mxu0
    %v740 = vadd.f32 %v671, %v739
    %v741 = vpop.f32.mrf.mxu0
    %742 = vdwg.mxu0
    %vm743 = vcmp.gt.f32.partialorder %v740, 0.0
    %v744 = vmul.f32 %v740, 0.2
    %v745 = vsel %vm743, %v740, %v744
    %s746 = scalar_lea.vmem [#allocation5], 896
    %v747 = vld [vmem:[%s746] sm:$0xff]
    %v748 = vld [vmem:[%s746 + $0x8] sm:$0xff]
    %v749 = vld [vmem:[%s746 + $0x10] sm:$0xff]
    %v750 = vld [vmem:[%s746 + $0x18] sm:$0xff]
    %v751 = vld [vmem:[%s746 + $0x20] sm:$0xff]
    %v752 = vld [vmem:[%s746 + $0x28] sm:$0xff]
    %v753 = vld [vmem:[%s746 + $0x30] sm:$0xff]
    %v754 = vld [vmem:[%s746 + $0x38] sm:$0xff]
    %v755 = vld [vmem:[%s746 + $0x40] sm:$0xff]
    %v756 = vld [vmem:[%s746 + $0x48] sm:$0xff]
    %v757 = vld [vmem:[%s746 + $0x50] sm:$0xff]
    %v758 = vld [vmem:[%s746 + $0x58] sm:$0xff]
    %v759 = vld [vmem:[%s746 + $0x60] sm:$0xff]
    %v760 = vld [vmem:[%s746 + $0x68] sm:$0xff]
    %v761 = vld [vmem:[%s746 + $0x70] sm:$0xff]
    %v762 = vld [vmem:[%s746 + $0x78] sm:$0xff]
    %s763 = scalar_lea.vmem [#allocation7], 7
    %v764 = vld [vmem:[%s763] sm:$0x1]
    %v766 = vlaneseq
    %v767 = vshrl.u32 %v766, 7
    %v768 = vsub.s32 0, %v767
    %v769 = vrot.slane %v764, %v768
    %771 = vmatprep.subr.mxu0 0.0
    %772 = vmatpush1.msra.mxu0 %v762
    %773 = vmatprep.subr.mxu0 0.0
    %774 = vmatpush1.msra.mxu0 %v761
    %775 = vmatprep.subr.mxu0 0.0
    %776 = vmatpush1.msra.mxu0 %v760
    %777 = vmatprep.subr.mxu0 0.0
    %778 = vmatpush1.msra.mxu0 %v759
    %779 = vmatprep.subr.mxu0 0.0
    %780 = vmatpush1.msra.mxu0 %v758
    %781 = vmatprep.subr.mxu0 0.0
    %782 = vmatpush1.msra.mxu0 %v757
    %783 = vmatprep.subr.mxu0 0.0
    %784 = vmatpush1.msra.mxu0 %v756
    %785 = vmatprep.subr.mxu0 0.0
    %786 = vmatpush1.msra.mxu0 %v755
    %787 = vmatprep.subr.mxu0 0.0
    %788 = vmatpush1.msra.mxu0 %v754
    %789 = vmatprep.subr.mxu0 0.0
    %790 = vmatpush1.msra.mxu0 %v753
    %791 = vmatprep.subr.mxu0 0.0
    %792 = vmatpush1.msra.mxu0 %v752
    %793 = vmatprep.subr.mxu0 0.0
    %794 = vmatpush1.msra.mxu0 %v751
    %795 = vmatprep.subr.mxu0 0.0
    %796 = vmatpush1.msra.mxu0 %v750
    %797 = vmatprep.subr.mxu0 0.0
    %798 = vmatpush1.msra.mxu0 %v749
    %799 = vmatprep.subr.mxu0 0.0
    %800 = vmatpush1.msra.mxu0 %v748
    %801 = vmatprep.subr.mxu0 0.0
    %802 = vmatpush1.msra.mxu0 %v747
    %803 = vmatprep.subr.mxu0 0.0
    %804 = vmatpush2.msra.mxu0 0.0
    %805 = vmatprep.subr.mxu0 0.0
    %806 = vmatpush2.msra.mxu0 0.0
    %807 = vmatprep.subr.mxu0 0.0
    %808 = vmatpush2.msra.mxu0 0.0
    %809 = vmatprep.subr.mxu0 0.0
    %810 = vmatpush2.msra.mxu0 0.0
    %811 = vmatprep.subr.mxu0 0.0
    %812 = vmatpush2.msra.mxu0 0.0
    %813 = vmatprep.subr.mxu0 0.0
    %814 = vmatpush2.msra.mxu0 0.0
    %815 = vmatprep.subr.mxu0 0.0
    %816 = vmatpush2.msra.mxu0 0.0
    %817 = vmatprep.subr.mxu0 0.0
    %818 = vmatpush2.msra.mxu0 0.0
    %819 = vmatprep.subr.mxu0 0.0
    %820 = vmatpush2.msra.mxu0 0.0
    %821 = vmatprep.subr.mxu0 0.0
    %822 = vmatpush2.msra.mxu0 0.0
    %823 = vmatprep.subr.mxu0 0.0
    %824 = vmatpush2.msra.mxu0 0.0
    %825 = vmatprep.subr.mxu0 0.0
    %826 = vmatpush2.msra.mxu0 0.0
    %827 = vmatprep.subr.mxu0 0.0
    %828 = vmatpush2.msra.mxu0 0.0
    %829 = vmatprep.subr.mxu0 0.0
    %830 = vmatpush2.msra.mxu0 0.0
    %831 = vmatprep.subr.mxu0 0.0
    %832 = vmatpush2.msra.mxu0 0.0
    %833 = vmatprep.subr.mxu0 0.0
    %834 = vmatpush2.msra.mxu0 0.0
    %835 = vmatprep.mubr.f32.mxu0 0.0
    %836 = vmatmul.mubr.f32.gmra.mxu0 %v745
    %v837 = vpop.f32.mrf.mxu0
    %v838 = vadd.f32 %v769, %v837
    %v839 = vpop.f32.mrf.mxu0
    %840 = vdwg.mxu0
    %vm841 = vcmp.gt.f32.partialorder %v838, 0.0
    %v842 = vmul.f32 %v838, 0.2
    %v843 = vsel %vm841, %v838, %v842
    %844 = vst [vmem:[#allocation8] sm:$0xff] %v843
    // Predicated region
    $region26: #{tpu_custom_call.1} parent=1 // pred_check
      _
    $region27: #{tpu_custom_call.1} parent=1 // pred_check_branch
      %846 = sbr.rel (0) target = $region29
    $region28: #{tpu_custom_call.1} parent=1 // pred_region
      %s848 = ssub.s32 128, 128
      %849 = vsyncadd [#allocation4], %s848
      %s851 = sshll.u32 [#allocation8], 4
      %s852 = int_to_ptr.vmem [resolvable:$true] %s851
      %854 = dma.vmem_to_hbm [thread:$0]  %s852, 128, %s3, [#allocation4]
    $region29: #{tpu_custom_call.1} parent=1 // pred_fallthru
      _
    // Predicated region
    $region30: #{tpu_custom_call.1} parent=1 // pred_check
      _
    $region31: #{tpu_custom_call.1} parent=1 // pred_check_branch
      %856 = sbr.rel (0) target = $region33
    $region32: #{tpu_custom_call.1} parent=1 // pred_region
      %857 = dma.done [#allocation4], 128
    $region33: #{tpu_custom_call.1} parent=1 // pred_fallthru
      _
    %858 = vsyncpa [#allocation3], 1
    %859 = vsyncpa [#allocation6], 1
    %860 = vsyncpa [#allocation4], 1

</llo_original>
